<compile_context>
chip_gen: v5e
topology: v5e:2x2
jax: 0.10.0
libtpu: 0.0.40
codegen_flags: <defaults>
</compile_context>

<pallas_src>
import functools

import jax
import jax.numpy as jnp
from jax import lax
from jax.experimental import pallas as pl
from jax.experimental.pallas import tpu as pltpu

# Fixed Sobel taps (same values as the PyTorch module __init__) — used only by
# the independent reference; the kernel uses the separable decomposition.
KERNEL_X = ((-1.0, 0.0, 1.0),
            (-2.0, 0.0, 2.0),
            (-1.0, 0.0, 1.0))
KERNEL_Y = (( 1.0,  2.0,  1.0),
            ( 0.0,  0.0,  0.0),
            (-1.0, -2.0, -1.0))


def _sobel_kernel(x_ref, o_ref, *scratch, real_w: int):
    """One grid step: bt whole images, full H, full (unpadded) W.

    x_ref / o_ref: (bt, H, W) blocks, W arbitrary.  Optional scratch:
    (bt, H, Wp) f32 halo buffer, present iff W is not a multiple of 128.
    """
    if scratch:
        pad_ref, = scratch
        # Zero every step (one cheap VMEM pass; keeps the pad columns zero on
        # every core under megacore grid sharding), then drop in the image.
        pad_ref[...] = jnp.zeros_like(pad_ref)
        pad_ref[:, :, :real_w] = x_ref[...].astype(jnp.float32)
        x = pad_ref[...]
    else:
        x = x_ref[...].astype(jnp.float32)

    bt, h, wp = x.shape

    # ---- vertical (sublane) pass: zero rows emulate padding=1 along H -------
    zrow = jnp.zeros((bt, 1, wp), dtype=jnp.float32)
    x_up = jnp.concatenate([zrow, x[:, : h - 1, :]], axis=1)   # row i -> x[i-1]
    x_dn = jnp.concatenate([x[:, 1:, :], zrow], axis=1)        # row i -> x[i+1]

    s = x_up + 2.0 * x + x_dn        # vertical smooth (feeds gx)
    d = x_up - x_dn                  # vertical diff   (feeds gy)

    # ---- horizontal (lane) pass via XLU rolls (positive static shifts) ------
    s_p = pltpu.roll(s, wp - 1, 2)   # col j -> s[:, :, j+1]
    s_m = pltpu.roll(s, 1, 2)        # col j -> s[:, :, j-1]
    d_p = pltpu.roll(d, wp - 1, 2)
    d_m = pltpu.roll(d, 1, 2)

    if not scratch:
        # W is already a multiple of 128: no spare zero pad column exists, so
        # the wrapped boundary columns are zeroed explicitly with a small
        # (1, 1, W) iota (broadcast inside the selects, no full-tile iota).
        col = lax.broadcasted_iota(jnp.int32, (1, 1, wp), 2)
        s_p = jnp.where(col == wp - 1, 0.0, s_p)
        d_p = jnp.where(col == wp - 1, 0.0, d_p)
        s_m = jnp.where(col == 0, 0.0, s_m)
        d_m = jnp.where(col == 0, 0.0, d_m)
    # else: zero pad columns absorb the wrap; garbage right of real_w is
    # dropped by the sliced store below.

    gx = s_p - s_m
    gy = d_m + 2.0 * d + d_p
    res = jnp.abs(gx) + jnp.abs(gy)

    if scratch:
        o_ref[...] = res[:, :, :real_w].astype(o_ref.dtype)
    else:
        o_ref[...] = res.astype(o_ref.dtype)


def _vmem_capacity_bytes():
    try:
        cap = getattr(pltpu.get_tpu_info(), "vmem_capacity_bytes", None)
        if cap:
            return int(cap)
    except Exception:
        pass
    return 64 << 20            # conservative default: v7x physical VMEM


def _num_tensorcores():
    try:
        dev = jax.devices()[0]
        nc = getattr(dev, "num_cores", None)
        if isinstance(nc, int) and nc > 0:
            return nc
        kind = str(getattr(dev, "device_kind", "")).lower()
        if any(tag in kind for tag in ("v4", "v5p", "v7")):
            return 2           # megacore-style chips: 2 TensorCores / device
    except Exception:
        pass
    return 1                   # v5e / v6e: single TensorCore


# Conservative count of simultaneously-live full-width f32 temporaries the
# body materializes (x, x_up, x_dn, s, d, 4 rolls, gx/gy/res overlap, ...).
_NUM_TEMPS = 9


def _per_image_vmem_bytes(h, w, wp, itemsize, padded):
    io = 4 * h * w * itemsize              # 2x input + 2x output (double buf)
    halo = (h * wp * 4) if padded else 0   # f32 width-padded scratch
    temps = _NUM_TEMPS * h * wp * 4        # f32 full-width temporaries
    return io + halo + temps


def _pick_batch_tile(n, per_img_bytes, num_cores, budget_bytes):
    """Largest divisor of n whose live VMEM fits the budget; on multi-core
    chips keep at least `num_cores` grid steps so every TensorCore gets work."""
    cap = int(max(1, min(n, budget_bytes // max(per_img_bytes, 1))))
    divisors = [d for d in range(1, n + 1) if n % d == 0]
    fitting = [d for d in divisors if d <= cap]
    bt = max(fitting) if fitting else 1
    if num_cores > 1:
        while bt > 1 and n // bt < min(num_cores, n):
            bt = max(d for d in divisors if d < bt)
    return bt


def sobelxy(x):
    """x: (N, 1, H, W) -> (N, 1, H, W), matching Sobelxy.forward."""
    n, c, h, w = x.shape
    assert c == 1, "Sobelxy weights are (1,1,3,3): input must have 1 channel"

    x3 = x.reshape(n, h, w)
    wp = max(128, pl.cdiv(w, 128) * 128)   # in-VMEM compute width (lane-dense)
    padded = wp != w
    itemsize = x.dtype.itemsize

    cap_bytes = _vmem_capacity_bytes()
    num_cores = _num_tensorcores()
    budget = int(cap_bytes * 0.6)          # headroom for Mosaic internal use

    per_img = _per_image_vmem_bytes(h, w, wp, itemsize, padded)
    bt = _pick_batch_tile(n, per_img, num_cores, budget)

    # TODO(synk): row-tile H (overlapping 1-row halo via manual pl.ANY DMA or
    # edge recompute) for images so large that even a bt=1 block exceeds the
    # per-chip VMEM budget (e.g. 4K frames on v7x's 64 MiB VMEM).

    est_live = per_img * bt
    vmem_limit = int(min(int(cap_bytes * 0.9),
                         max(int(1.5 * est_live) + (8 << 20), 32 << 20)))

    scratch_shapes = [pltpu.VMEM((bt, h, wp), jnp.float32)] if padded else []
    kernel = functools.partial(_sobel_kernel, real_w=w)

    out = pl.pallas_call(
        kernel,
        out_shape=jax.ShapeDtypeStruct((n, h, w), x.dtype),
        grid=(n // bt,),
        in_specs=[pl.BlockSpec((bt, h, w), lambda i: (i, 0, 0))],
        out_specs=pl.BlockSpec((bt, h, w), lambda i: (i, 0, 0)),
        scratch_shapes=scratch_shapes,
        compiler_params=pltpu.CompilerParams(
            dimension_semantics=("parallel",),
            vmem_limit_bytes=vmem_limit),
        cost_estimate=pl.CostEstimate(
            flops=12 * n * h * w,
            transcendentals=0,
            bytes_accessed=2 * n * h * w * itemsize),
    )(x3)

    return out.reshape(n, 1, h, w)


def _reference(x):
    """Independent JAX reference using lax conv (NCHW, OIHW, padding=1)."""
    kx = jnp.asarray(KERNEL_X, dtype=jnp.float32).reshape(1, 1, 3, 3)
    ky = jnp.asarray(KERNEL_Y, dtype=jnp.float32).reshape(1, 1, 3, 3)
    dn = lax.conv_dimension_numbers(x.shape, kx.shape, ("NCHW", "OIHW", "NCHW"))
    xf = x.astype(jnp.float32)
    sx = lax.conv_general_dilated(xf, kx, (1, 1), ((1, 1), (1, 1)),
                                  dimension_numbers=dn)
    sy = lax.conv_general_dilated(xf, ky, (1, 1), ((1, 1), (1, 1)),
                                  dimension_numbers=dn)
    return (jnp.abs(sx) + jnp.abs(sy)).astype(x.dtype)


if __name__ == "__main__":
    # Primary shape: single-channel NCHW image batch, W < 128 (scratch path).
    x = jax.random.normal(jax.random.PRNGKey(0), (2, 1, 16, 16),
                          dtype=jnp.float32)
    out = jax.block_until_ready(sobelxy(x))
    assert out.shape == (2, 1, 16, 16)
    assert jnp.allclose(out, _reference(x), atol=1e-5, rtol=1e-5), \
        "mismatch vs reference (shape 1)"

    # Unaligned width + multi-image grid (N=4, H=24, W=40 -> Wp=128 in VMEM).
    x2 = jax.random.normal(jax.random.PRNGKey(1), (4, 1, 24, 40),
                           dtype=jnp.float32)
    out2 = jax.block_until_ready(sobelxy(x2))
    assert jnp.allclose(out2, _reference(x2), atol=1e-5, rtol=1e-5), \
        "mismatch vs reference (shape 2)"

    # Width already a multiple of 128 (no scratch; boundary-mask path).
    x3 = jax.random.normal(jax.random.PRNGKey(2), (2, 1, 8, 128),
                           dtype=jnp.float32)
    out3 = jax.block_until_ready(sobelxy(x3))
    assert jnp.allclose(out3, _reference(x3), atol=1e-5, rtol=1e-5), \
        "mismatch vs reference (shape 3)"

    print("KERNEL_OK")
</pallas_src>

<mosaic_0001>
module attributes {stable_mosaic.version = 11 : i64} {
  func.func @_sobel_kernel(%arg0: i32, %arg1: memref<2x16x16xf32, #tpu.memory_space<vmem>>, %arg2: memref<2x16x16xf32, #tpu.memory_space<vmem>>, %arg3: memref<2x16x128xf32, #tpu.memory_space<vmem>>) attributes {dimension_semantics = [#tpu.dimension_semantics<parallel>], iteration_bounds = array<i64: 1>, scalar_prefetch = 0 : i64, scratch_operands = 1 : i64, tpu.core_type = #tpu.core_type<tc>, window_params = [{transform_indices = @transform_0, window_bounds = array<i64: 2, 16, 16>}, {transform_indices = @transform_1, window_bounds = array<i64: 2, 16, 16>}]} {
    %cst = arith.constant 0.000000e+00 : f32
    %0 = vector.broadcast %cst : f32 to vector<2x16x128xf32>
    %c0 = arith.constant 0 : index
    %c0_0 = arith.constant 0 : index
    %c0_1 = arith.constant 0 : index
    %1 = vector.load %arg3[%c0, %c0_0, %c0_1] : memref<2x16x128xf32, #tpu.memory_space<vmem>>, vector<2x16x128xf32>
    tpu.vector_store %arg3[%c0, %c0_0, %c0_1], %0 {strides = array<i32>} : memref<2x16x128xf32, #tpu.memory_space<vmem>>, vector<2x16x128xf32>,
    %c0_2 = arith.constant 0 : index
    %c0_3 = arith.constant 0 : index
    %c0_4 = arith.constant 0 : index
    %2 = vector.load %arg1[%c0_2, %c0_3, %c0_4] : memref<2x16x16xf32, #tpu.memory_space<vmem>>, vector<2x16x16xf32>
    %c0_5 = arith.constant 0 : index
    %c0_6 = arith.constant 0 : index
    %c0_7 = arith.constant 0 : index
    %3 = vector.load %arg3[%c0_5, %c0_6, %c0_7] : memref<2x16x128xf32, #tpu.memory_space<vmem>>, vector<2x16x16xf32>
    tpu.vector_store %arg3[%c0_5, %c0_6, %c0_7], %2 {strides = array<i32>} : memref<2x16x128xf32, #tpu.memory_space<vmem>>, vector<2x16x16xf32>,
    %c0_8 = arith.constant 0 : index
    %c0_9 = arith.constant 0 : index
    %c0_10 = arith.constant 0 : index
    %4 = vector.load %arg3[%c0_8, %c0_9, %c0_10] : memref<2x16x128xf32, #tpu.memory_space<vmem>>, vector<2x16x128xf32>
    %cst_11 = arith.constant 0.000000e+00 : f32
    %5 = vector.broadcast %cst_11 : f32 to vector<2x1x128xf32>
    %6 = vector.extract_strided_slice %4 {offsets = [0, 0, 0], sizes = [2, 15, 128], strides = [1, 1, 1]} : vector<2x16x128xf32> to vector<2x15x128xf32>
    %7 = tpu.concatenate %5, %6 in 1 : vector<2x1x128xf32>, vector<2x15x128xf32> -> vector<2x16x128xf32>
    %8 = vector.extract_strided_slice %4 {offsets = [0, 1, 0], sizes = [2, 15, 128], strides = [1, 1, 1]} : vector<2x16x128xf32> to vector<2x15x128xf32>
    %9 = tpu.concatenate %8, %5 in 1 : vector<2x15x128xf32>, vector<2x1x128xf32> -> vector<2x16x128xf32>
    %cst_12 = arith.constant 2.000000e+00 : f32
    %10 = vector.broadcast %cst_12 : f32 to vector<2x16x128xf32>
    %11 = arith.mulf %10, %4 : vector<2x16x128xf32>
    %12 = arith.addf %7, %11 : vector<2x16x128xf32>
    %13 = arith.addf %12, %9 : vector<2x16x128xf32>
    %14 = arith.subf %7, %9 : vector<2x16x128xf32>
    %c127_i32 = arith.constant 127 : i32
    %15 = tpu.dynamic_rotate %13 by %c127_i32 dim 2 : vector<2x16x128xf32>, i32 -> vector<2x16x128xf32>
    %c1_i32 = arith.constant 1 : i32
    %16 = tpu.dynamic_rotate %13 by %c1_i32 dim 2 : vector<2x16x128xf32>, i32 -> vector<2x16x128xf32>
    %c127_i32_13 = arith.constant 127 : i32
    %17 = tpu.dynamic_rotate %14 by %c127_i32_13 dim 2 : vector<2x16x128xf32>, i32 -> vector<2x16x128xf32>
    %c1_i32_14 = arith.constant 1 : i32
    %18 = tpu.dynamic_rotate %14 by %c1_i32_14 dim 2 : vector<2x16x128xf32>, i32 -> vector<2x16x128xf32>
    %19 = arith.subf %15, %16 : vector<2x16x128xf32>
    %cst_15 = arith.constant 2.000000e+00 : f32
    %20 = vector.broadcast %cst_15 : f32 to vector<2x16x128xf32>
    %21 = arith.mulf %20, %14 : vector<2x16x128xf32>
    %22 = arith.addf %18, %21 : vector<2x16x128xf32>
    %23 = arith.addf %22, %17 : vector<2x16x128xf32>
    %24 = math.absf %19 : vector<2x16x128xf32>
    %25 = math.absf %23 : vector<2x16x128xf32>
    %26 = arith.addf %24, %25 : vector<2x16x128xf32>
    %27 = vector.extract_strided_slice %26 {offsets = [0, 0, 0], sizes = [2, 16, 16], strides = [1, 1, 1]} : vector<2x16x128xf32> to vector<2x16x16xf32>
    %c0_16 = arith.constant 0 : index
    %c0_17 = arith.constant 0 : index
    %c0_18 = arith.constant 0 : index
    %28 = vector.load %arg2[%c0_16, %c0_17, %c0_18] : memref<2x16x16xf32, #tpu.memory_space<vmem>>, vector<2x16x16xf32>
    tpu.vector_store %arg2[%c0_16, %c0_17, %c0_18], %27 {strides = array<i32>} : memref<2x16x16xf32, #tpu.memory_space<vmem>>, vector<2x16x16xf32>,
    return
  }
  func.func @transform_0(%arg0: i32) -> (i32, i32, i32) {
    %c0_i32 = arith.constant 0 : i32
    %c0_i32_0 = arith.constant 0 : i32
    %c0_i32_1 = arith.constant 0 : i32
    return %arg0, %c0_i32, %c0_i32_0 : i32, i32, i32
  }
  func.func @transform_1(%arg0: i32) -> (i32, i32, i32) {
    %c0_i32 = arith.constant 0 : i32
    %c0_i32_0 = arith.constant 0 : i32
    %c0_i32_1 = arith.constant 0 : i32
    return %arg0, %c0_i32, %c0_i32_0 : i32, i32, i32
  }
}

</mosaic_0001>

<llo_original>
// kernel: tpu_custom_call.1
$region0: #{tpu_custom_call.1}
  #allocation0 [shape = 'u32[]', space=smem, size = 0x4, offset = 0x4, fixed_abs, tag = 'smem constant byte address 0x4 - core index']
  #allocation1 [shape = 'u32[72,128]{1,0:T(1,128)}', space=vmem, size = 0x9000, scoped, tag = 'internal scratch']
  #allocation2 [shape = 'f32[2,16,128]{2,1,0:T(8,128)}', space=vmem, size = 0x4000, scoped, tag = 'scratch operand']
  %s0 = inlined_call_operand.hbm [shape: f32[2,16,16], index: 0, kind: input, shape index: {}]
  %s1 = inlined_call_operand.hbm [shape: f32[2,16,16], index: 1, kind: output, shape index: {}]
  %s2 = sld [smem:[#allocation0]]
  $region18: #{tpu_custom_call.1} parent=0
    _
  %s4 = ssub.s32 1, %s2
  %s5 = scalar_select 0, %s4, %s2
  $region1: #{tpu_custom_call.1} parent=0
    #allocation3 [shape = 'u8[16384]{0}', space=vmem, size = 0x4000, scoped, tag = 'input window, operand 0, single buffered']
    #allocation4 [shape = 's32[1]{0}', space=sflag, size = 0x4, scoped, tag = 'scoped memory for tpu_custom_call.1']
    #allocation5 [shape = 's32[1]{0}', space=sflag, size = 0x4, scoped, tag = 'scoped memory for tpu_custom_call.1']
    #allocation6 [shape = 'u8[16384]{0}', space=vmem, size = 0x4000, scoped, tag = 'output window, operand 0, single buffered']
    %6 = vsyncpa [#allocation4], 0
    %7 = vsyncpa [#allocation5], 0
    // Predicated region
    $region2: #{tpu_custom_call.1} parent=1 // pred_check
      _
    $region3: #{tpu_custom_call.1} parent=1 // pred_check_branch
      %9 = sbr.rel (0) target = $region5
    $region4: #{tpu_custom_call.1} parent=1 // pred_region
      %11 = vsyncadd [#allocation4], 0
      %s12 = sshll.u32 %s0, 4
      %s13 = int_to_ptr.hbm [resolvable:$true] %s12
      %s14 = sshll.u32 [#allocation3], 4
      %s15 = int_to_ptr.vmem [resolvable:$true] %s14
      %20 = dma.hbm_to_vmem [thread:$0]  %s13, 512, %s15, [#allocation4], 128, 128, 8
    $region5: #{tpu_custom_call.1} parent=1 // pred_fallthru
      _
    // Predicated region
    $region6: #{tpu_custom_call.1} parent=1 // pred_check
      _
    $region7: #{tpu_custom_call.1} parent=1 // pred_check_branch
      %22 = sbr.rel (0) target = $region9
    $region8: #{tpu_custom_call.1} parent=1 // pred_region
      %24 = dma.done [#allocation4], 512
    $region9: #{tpu_custom_call.1} parent=1 // pred_fallthru
      _
    %25 = vst [vmem:[#allocation2] sm:$0xff] 0.0
    %26 = vst [vmem:[#allocation2 + $0x8] sm:$0xff] 0.0
    %27 = vst [vmem:[#allocation2 + $0x10] sm:$0xff] 0.0
    %28 = vst [vmem:[#allocation2 + $0x18] sm:$0xff] 0.0
    %v29 = vld [vmem:[#allocation3] sm:$0xff]
    %v30 = vld [vmem:[#allocation3 + $0x8] sm:$0xff]
    %v31 = vld [vmem:[#allocation3 + $0x10] sm:$0xff]
    %v32 = vld [vmem:[#allocation3 + $0x18] sm:$0xff]
    %vm33 = vcmask 130048
    %34 = vst.msk [vmem:[#allocation2] sm:$0xff] %vm33, %v29
    %35 = vst.msk [vmem:[#allocation2 + $0x8] sm:$0xff] %vm33, %v30
    %36 = vst.msk [vmem:[#allocation2 + $0x10] sm:$0xff] %vm33, %v31
    %37 = vst.msk [vmem:[#allocation2 + $0x18] sm:$0xff] %vm33, %v32
    %v38 = vld [vmem:[#allocation2] sm:$0xff]
    %v39 = vld [vmem:[#allocation2 + $0x8] sm:$0xff]
    %v40 = vld [vmem:[#allocation2 + $0x10] sm:$0xff]
    %v41 = vld [vmem:[#allocation2 + $0x18] sm:$0xff]
    %vm46 = vcmask 1040384
    %v47 = vrot.slane %v38, 7
    %v48 = vrot.slane %v39, 7
    %v49 = vsel %vm46, %v47, %v48
    %v50 = vrot.slane %v40, 7
    %v51 = vrot.slane %v41, 7
    %v52 = vsel %vm46, %v50, %v51
    %v57 = vsel %vm46, 0.0, %v47
    %v58 = vsel %vm46, 0.0, %v50
    %vm59 = vcmask 1046528
    %v60 = vrot.slane %v38, 1
    %v61 = vrot.slane %v39, 1
    %v62 = vsel %vm59, %v60, %v61
    %v63 = vrot.slane %v40, 1
    %v64 = vrot.slane %v41, 1
    %v65 = vsel %vm59, %v63, %v64
    %v70 = vsel %vm59, %v61, 0.0
    %v71 = vsel %vm59, %v64, 0.0
    %v72 = vmul.f32 %v38, 2.0
    %v73 = vmul.f32 %v39, 2.0
    %v74 = vmul.f32 %v40, 2.0
    %v75 = vmul.f32 %v41, 2.0
    %v76 = vadd.f32 %v57, %v72
    %v77 = vadd.f32 %v49, %v73
    %v78 = vadd.f32 %v58, %v74
    %v79 = vadd.f32 %v52, %v75
    %v80 = vadd.f32 %v76, %v62
    %v81 = vadd.f32 %v77, %v70
    %v82 = vadd.f32 %v78, %v65
    %v83 = vadd.f32 %v79, %v71
    %v84 = vsub.f32 %v57, %v62
    %v85 = vsub.f32 %v49, %v70
    %v86 = vsub.f32 %v58, %v65
    %v87 = vsub.f32 %v52, %v71
    %88 = vrot.lane.b32.xlu0 %v80, 127
    %v89 = vpop.permute.xlu0 %88
    %90 = vrot.lane.b32.xlu0 %v81, 127
    %v91 = vpop.permute.xlu0 %90
    %92 = vrot.lane.b32.xlu0 %v82, 127
    %v93 = vpop.permute.xlu0 %92
    %94 = vrot.lane.b32.xlu0 %v83, 127
    %v95 = vpop.permute.xlu0 %94
    %96 = vrot.lane.b32.xlu0 %v80, 1
    %v97 = vpop.permute.xlu0 %96
    %98 = vrot.lane.b32.xlu0 %v81, 1
    %v99 = vpop.permute.xlu0 %98
    %100 = vrot.lane.b32.xlu0 %v82, 1
    %v101 = vpop.permute.xlu0 %100
    %102 = vrot.lane.b32.xlu0 %v83, 1
    %v103 = vpop.permute.xlu0 %102
    %104 = vrot.lane.b32.xlu0 %v84, 127
    %v105 = vpop.permute.xlu0 %104
    %106 = vrot.lane.b32.xlu0 %v85, 127
    %v107 = vpop.permute.xlu0 %106
    %108 = vrot.lane.b32.xlu0 %v86, 127
    %v109 = vpop.permute.xlu0 %108
    %110 = vrot.lane.b32.xlu0 %v87, 127
    %v111 = vpop.permute.xlu0 %110
    %112 = vrot.lane.b32.xlu0 %v84, 1
    %v113 = vpop.permute.xlu0 %112
    %114 = vrot.lane.b32.xlu0 %v85, 1
    %v115 = vpop.permute.xlu0 %114
    %116 = vrot.lane.b32.xlu0 %v86, 1
    %v117 = vpop.permute.xlu0 %116
    %118 = vrot.lane.b32.xlu0 %v87, 1
    %v119 = vpop.permute.xlu0 %118
    %v120 = vsub.f32 %v89, %v97
    %v121 = vsub.f32 %v91, %v99
    %v122 = vsub.f32 %v93, %v101
    %v123 = vsub.f32 %v95, %v103
    %v124 = vmul.f32 %v84, 2.0
    %v125 = vmul.f32 %v85, 2.0
    %v126 = vmul.f32 %v86, 2.0
    %v127 = vmul.f32 %v87, 2.0
    %v128 = vadd.f32 %v113, %v124
    %v129 = vadd.f32 %v115, %v125
    %v130 = vadd.f32 %v117, %v126
    %v131 = vadd.f32 %v119, %v127
    %v132 = vadd.f32 %v128, %v105
    %v133 = vadd.f32 %v129, %v107
    %v134 = vadd.f32 %v130, %v109
    %v135 = vadd.f32 %v131, %v111
    %v136 = vand.u32 2147483647, %v120
    %v137 = vand.u32 2147483647, %v121
    %v138 = vand.u32 2147483647, %v122
    %v139 = vand.u32 2147483647, %v123
    %v140 = vand.u32 2147483647, %v132
    %v141 = vand.u32 2147483647, %v133
    %v142 = vand.u32 2147483647, %v134
    %v143 = vand.u32 2147483647, %v135
    %v144 = vadd.f32 %v136, %v140
    %v145 = vadd.f32 %v137, %v141
    %v146 = vadd.f32 %v138, %v142
    %v147 = vadd.f32 %v139, %v143
    %148 = vst.msk [vmem:[#allocation6] sm:$0xff] %vm33, %v144
    %149 = vst.msk [vmem:[#allocation6 + $0x8] sm:$0xff] %vm33, %v145
    %150 = vst.msk [vmem:[#allocation6 + $0x10] sm:$0xff] %vm33, %v146
    %151 = vst.msk [vmem:[#allocation6 + $0x18] sm:$0xff] %vm33, %v147
    // Predicated region
    $region10: #{tpu_custom_call.1} parent=1 // pred_check
      _
    $region11: #{tpu_custom_call.1} parent=1 // pred_check_branch
      %153 = sbr.rel (0) target = $region13
    $region12: #{tpu_custom_call.1} parent=1 // pred_region
      %155 = vsyncadd [#allocation5], 0
      %s156 = sshll.u32 [#allocation6], 4
      %s157 = int_to_ptr.vmem [resolvable:$true] %s156
      %s158 = sshll.u32 %s1, 4
      %s159 = int_to_ptr.hbm [resolvable:$true] %s158
      %164 = dma.vmem_to_hbm [thread:$0]  %s157, 512, %s159, [#allocation5], 128, 128, 8
    $region13: #{tpu_custom_call.1} parent=1 // pred_fallthru
      _
    // Predicated region
    $region14: #{tpu_custom_call.1} parent=1 // pred_check
      _
    $region15: #{tpu_custom_call.1} parent=1 // pred_check_branch
      %166 = sbr.rel (0) target = $region17
    $region16: #{tpu_custom_call.1} parent=1 // pred_region
      %168 = dma.done [#allocation5], 512
    $region17: #{tpu_custom_call.1} parent=1 // pred_fallthru
      _
    %169 = vsyncpa [#allocation4], 1
    %170 = vsyncpa [#allocation5], 1

</llo_original>
